<compile_context>
chip_gen: v7x
topology: tpu7x:2x2x1
jax: 0.10.0
libtpu: 0.0.40
codegen_flags: <defaults>
</compile_context>

<pallas_src>
import math

import jax
import jax.numpy as jnp
from jax.experimental import pallas as pl
from jax.experimental.pallas import tpu as pltpu


def _round_up(x, m):
    return ((x + m - 1) // m) * m


def _cdiv(a, b):
    return (a + b - 1) // b


def _sublane_multiple(dtype):
    # Minimum second-to-last-dim tile: 8 for 4-byte, 16 for 2-byte, 32 for 1-byte.
    return max(8, 32 // jnp.dtype(dtype).itemsize)


def noisy_linear_kernel(x_ref, wt_ref, vwt_ref, b_ref, eps_in_ref, o_ref, acc_ref):
    """Single-accumulator fused NoisyLinear tile.

       acc += x @ W^T
       acc += (x * eps_in) @ (var_W^T pre-scaled by eps_out)   # eps_out folded in prepare
       out  = acc + (b + var_b * eps_out)                      # bias pre-fused in prepare
    """
    k = pl.program_id(2)

    @pl.when(k == 0)
    def _():
        acc_ref[...] = jnp.zeros_like(acc_ref)

    x = x_ref[...]                                              # (tm, tk)
    # Two MXU passes into one shared f32 accumulator: keeps partial sums in the
    # MXU result buffer on v7x and issues one (tm, tn) accumulator writeback
    # stream per K step instead of two (vst is the scarce slot on v5e).
    acc_ref[...] += jnp.dot(x, wt_ref[...], preferred_element_type=jnp.float32)
    acc_ref[...] += jnp.dot(x * eps_in_ref[...], vwt_ref[...],
                            preferred_element_type=jnp.float32)

    @pl.when(k == pl.num_programs(2) - 1)
    def _():
        o_ref[...] = (acc_ref[...] + b_ref[...]).astype(o_ref.dtype)


def noisy_linear_config(batch, in_features, out_features, dtype=jnp.float32,
                        tm_cap=512, tk_cap=1024, tn_cap=1024):
    """Choose tile sizes / padded shapes once per (shape, dtype) — not per call."""
    sub = _sublane_multiple(dtype)
    itemsize = jnp.dtype(dtype).itemsize

    # M: split into the fewest tiles, then round each tile up to the sublane
    # multiple -> minimal padding waste (batch=300 pads to 304, not 512).
    n_i = max(1, _cdiv(batch, tm_cap))
    tm = _round_up(_cdiv(batch, n_i), sub)
    pm = tm * n_i

    # K: lane-aligned (multiple of 128) tiles, large caps for efficient weight DMAs.
    k_tiles = _cdiv(in_features, 128)
    n_k = max(1, _cdiv(k_tiles, tk_cap // 128))
    tk = 128 * _cdiv(k_tiles, n_k)
    pk = tk * n_k

    # N: same, plus guarantee >=2 blocks on a "parallel" axis when the batch axis
    # has only one block, so both TensorCores on v7x megacore get work.
    n_tiles = _cdiv(out_features, 128)
    n_j = max(1, _cdiv(n_tiles, tn_cap // 128))
    if n_i == 1 and n_tiles >= 2:
        n_j = max(n_j, 2)
    tn = 128 * _cdiv(n_tiles, n_j)
    pn = tn * n_j

    # Double-buffered VMEM working set estimate; raise the scoped limit to match
    # (defaults: 16 MiB v5e, 32 MiB v6e/v7x) while leaving headroom on v7x's
    # 64 MiB physical VMEM.
    vmem_est = (2 * tm * tk * itemsize            # x tiles
                + 2 * 2 * tk * tn * itemsize      # W^T + pre-scaled var_W^T tiles
                + 2 * tm * tn * itemsize          # output tiles
                + tm * tn * 4                     # f32 accumulator scratch
                + 2 * 8 * tn * 4 + 2 * 8 * tk * itemsize)   # bias / eps_in rows
    vmem_limit = int(min(48 * 1024 * 1024,
                         max(32 * 1024 * 1024, int(vmem_est * 1.3))))

    return dict(batch=batch, in_features=in_features, out_features=out_features,
                dtype=dtype, tm=tm, tk=tk, tn=tn, pm=pm, pk=pk, pn=pn,
                vmem_limit_bytes=vmem_limit)


def prepare_noisy_linear(matrix, var_matrix, bias, var_bias, eps_in, eps_out, cfg):
    """Once-per-noise-sample preparation (NOT in the per-forward hot path).

    * transpose weights to (in, out) so the kernel never transposes,
    * fold eps_out into var_W^T columns and into the bias -> single-accumulator kernel,
    * pad weights/vectors to the tile grid so the forward never re-pads them in HBM.
    """
    dtype = cfg["dtype"]
    in_f, out_f = cfg["in_features"], cfg["out_features"]
    pk, pn = cfg["pk"], cfg["pn"]

    w_t = jnp.transpose(matrix).astype(dtype)                          # (in, out)
    vw_t_scaled = jnp.transpose(var_matrix * eps_out[:, None]).astype(dtype)
    b_fused = (bias + var_bias * eps_out).astype(jnp.float32)

    wt_p = jnp.pad(w_t, ((0, pk - in_f), (0, pn - out_f)))
    vwt_p = jnp.pad(vw_t_scaled, ((0, pk - in_f), (0, pn - out_f)))
    b_p = jnp.pad(b_fused, (0, pn - out_f)).reshape(1, pn)
    ei_p = jnp.pad(eps_in.astype(dtype), (0, pk - in_f)).reshape(1, pk)
    return wt_p, vwt_p, b_p, ei_p


def noisy_linear(x, wt_p, vwt_p, b_p, ei_p, cfg):
    """Forward: out = x @ (W + var_W*outer(eps_out, eps_in))^T + (b + var_b*eps_out)."""
    batch, in_f = x.shape
    tm, tk, tn = cfg["tm"], cfg["tk"], cfg["tn"]
    pm, pk, pn = cfg["pm"], cfg["pk"], cfg["pn"]
    dtype = cfg["dtype"]
    itemsize = jnp.dtype(dtype).itemsize

    xp = x.astype(dtype)
    if (pm, pk) != (batch, in_f):
        xp = jnp.pad(xp, ((0, pm - batch), (0, pk - in_f)))    # only x is padded per call

    grid = (pm // tm, pn // tn, pk // tk)

    cost = pl.CostEstimate(
        flops=4 * pm * pn * pk,                                # two MXU matmuls
        transcendentals=0,
        bytes_accessed=((2 * pk * pn + pm * pk + pm * pn) * itemsize
                        + 4 * pn + pk * itemsize),
    )

    out_p = pl.pallas_call(
        noisy_linear_kernel,
        out_shape=jax.ShapeDtypeStruct((pm, pn), x.dtype),
        grid_spec=pltpu.PrefetchScalarGridSpec(
            num_scalar_prefetch=0,
            grid=grid,
            in_specs=[
                pl.BlockSpec((tm, tk), lambda i, j, k: (i, k)),   # x
                pl.BlockSpec((tk, tn), lambda i, j, k: (k, j)),   # W^T            (in, out)
                pl.BlockSpec((tk, tn), lambda i, j, k: (k, j)),   # var_W^T * eps_out
                pl.BlockSpec((1, tn), lambda i, j, k: (0, j)),    # fused bias (re-DMA only on j change)
                pl.BlockSpec((1, tk), lambda i, j, k: (0, k)),    # eps_in row (tiny, overlapped)
            ],
            out_specs=pl.BlockSpec((tm, tn), lambda i, j, k: (i, j)),
            scratch_shapes=[pltpu.VMEM((tm, tn), jnp.float32)],   # single f32 accumulator
        ),
        compiler_params=pltpu.CompilerParams(
            dimension_semantics=("parallel", "parallel", "arbitrary"),
            vmem_limit_bytes=cfg["vmem_limit_bytes"],
        ),
        cost_estimate=cost,
    )(xp, wt_p, vwt_p, b_p, ei_p)

    return out_p[:batch, :cfg["out_features"]]


def init_noisy_linear_params(key, in_features, out_features, dtype=jnp.float32):
    """Deterministic init mirroring NoisyLinear.reset_parameters semantics."""
    k_w, k_b = jax.random.split(key)
    bound = 1.0 / math.sqrt(in_features)
    # kaiming_uniform_(a=sqrt(5)) on (out, in) -> uniform(-1/sqrt(fan_in), 1/sqrt(fan_in))
    matrix = jax.random.uniform(k_w, (out_features, in_features),
                                dtype=dtype, minval=-bound, maxval=bound)
    var_matrix = jnp.full((out_features, in_features), 0.5 * bound, dtype=dtype)
    bias = jax.random.uniform(k_b, (out_features,),
                              dtype=dtype, minval=-bound, maxval=bound)
    var_bias = jnp.full((out_features,), 0.5 * bound, dtype=dtype)
    return matrix, var_matrix, bias, var_bias


if __name__ == "__main__":
    batch = 8
    in_features = 32
    out_features = 64

    key = jax.random.PRNGKey(0)
    k_params, k_x, k_ei, k_eo = jax.random.split(key, 4)

    matrix, var_matrix, bias, var_bias = init_noisy_linear_params(
        k_params, in_features, out_features)

    x = jax.random.normal(k_x, (batch, in_features), dtype=jnp.float32)

    # factorised=True noise: eps_input ~ N(0,1) (in,), eps_output ~ N(0,1) (out,)
    # TODO(synk): noise sampling (torch.randn in forward) stays in plain JAX, not in-kernel.
    eps_in = jax.random.normal(k_ei, (in_features,), dtype=jnp.float32)
    eps_out = jax.random.normal(k_eo, (out_features,), dtype=jnp.float32)

    cfg = noisy_linear_config(batch, in_features, out_features, dtype=jnp.float32)

    # Once-per-noise-sample prep: transpose, eps_out/bias folding, tile-grid padding.
    wt_p, vwt_p, b_p, ei_p = prepare_noisy_linear(
        matrix, var_matrix, bias, var_bias, eps_in, eps_out, cfg)

    out = noisy_linear(x, wt_p, vwt_p, b_p, ei_p, cfg)
    out = jax.block_until_ready(out)

    # Reference check in plain JAX (same semantics as the PyTorch forward).
    eps_matrix = eps_out[:, None] * eps_in[None, :]
    w_pert = matrix + var_matrix * eps_matrix
    b_pert = bias + var_bias * eps_out
    ref = x @ w_pert.T + b_pert
    assert jnp.allclose(out, ref, atol=1e-5, rtol=1e-5), "mismatch vs reference"

    print("KERNEL_OK")
</pallas_src>

<mosaic_0001>
module attributes {stable_mosaic.version = 11 : i64} {
  func.func @noisy_linear_kernel(%arg0: i32, %arg1: i32, %arg2: i32, %arg3: memref<8x128xf32, #tpu.memory_space<vmem>>, %arg4: memref<128x128xf32, #tpu.memory_space<vmem>>, %arg5: memref<128x128xf32, #tpu.memory_space<vmem>>, %arg6: memref<1x128xf32, #tpu.memory_space<vmem>>, %arg7: memref<1x128xf32, #tpu.memory_space<vmem>>, %arg8: memref<8x128xf32, #tpu.memory_space<vmem>>, %arg9: memref<8x128xf32, #tpu.memory_space<vmem>>) attributes {dimension_semantics = [#tpu.dimension_semantics<parallel>, #tpu.dimension_semantics<parallel>, #tpu.dimension_semantics<arbitrary>], iteration_bounds = array<i64: 1, 1, 1>, scalar_prefetch = 0 : i64, scratch_operands = 1 : i64, tpu.core_type = #tpu.core_type<tc>, window_params = [{transform_indices = @transform_0, window_bounds = array<i64: 8, 128>}, {transform_indices = @transform_1, window_bounds = array<i64: 128, 128>}, {transform_indices = @transform_2, window_bounds = array<i64: 128, 128>}, {transform_indices = @transform_3, window_bounds = array<i64: 1, 128>}, {transform_indices = @transform_4, window_bounds = array<i64: 1, 128>}, {transform_indices = @transform_5, window_bounds = array<i64: 8, 128>}]} {
    %c0_i32 = arith.constant 0 : i32
    %0 = arith.cmpi eq, %arg2, %c0_i32 : i32
    %1 = arith.extui %0 : i1 to i32
    %c0_i32_0 = arith.constant 0 : i32
    %2 = arith.cmpi ne, %1, %c0_i32_0 : i32
    scf.if %2 {
      %cst_19 = arith.constant 0.000000e+00 : f32
      %20 = vector.broadcast %cst_19 : f32 to vector<8x128xf32>
      %c0_20 = arith.constant 0 : index
      %c0_21 = arith.constant 0 : index
      %21 = vector.load %arg9[%c0_20, %c0_21] : memref<8x128xf32, #tpu.memory_space<vmem>>, vector<8x128xf32>
      tpu.vector_store %arg9[%c0_20, %c0_21], %20 {strides = array<i32>} : memref<8x128xf32, #tpu.memory_space<vmem>>, vector<8x128xf32>,
    } else {
    }
    %c0 = arith.constant 0 : index
    %c0_1 = arith.constant 0 : index
    %3 = vector.load %arg3[%c0, %c0_1] : memref<8x128xf32, #tpu.memory_space<vmem>>, vector<8x128xf32>
    %c0_2 = arith.constant 0 : index
    %c0_3 = arith.constant 0 : index
    %4 = vector.load %arg9[%c0_2, %c0_3] : memref<8x128xf32, #tpu.memory_space<vmem>>, vector<8x128xf32>
    %c0_4 = arith.constant 0 : index
    %c0_5 = arith.constant 0 : index
    %5 = vector.load %arg4[%c0_4, %c0_5] : memref<128x128xf32, #tpu.memory_space<vmem>>, vector<128x128xf32>
    %cst = arith.constant dense<0.000000e+00> : vector<8x128xf32>
    %6 = tpu.matmul %3, %5, %cst {dimension_numbers = #tpu.dot_dimension_numbers<[1], [0], [0], [1], [0, 0, 1, 1], [], []>} : vector<8x128xf32>, vector<128x128xf32>, vector<8x128xf32> -> vector<8x128xf32>
    %7 = arith.addf %4, %6 : vector<8x128xf32>
    %c0_6 = arith.constant 0 : index
    %c0_7 = arith.constant 0 : index
    %8 = vector.load %arg9[%c0_6, %c0_7] : memref<8x128xf32, #tpu.memory_space<vmem>>, vector<8x128xf32>
    tpu.vector_store %arg9[%c0_6, %c0_7], %7 {strides = array<i32>} : memref<8x128xf32, #tpu.memory_space<vmem>>, vector<8x128xf32>,
    %c0_8 = arith.constant 0 : index
    %c0_9 = arith.constant 0 : index
    %9 = vector.load %arg9[%c0_8, %c0_9] : memref<8x128xf32, #tpu.memory_space<vmem>>, vector<8x128xf32>
    %c0_10 = arith.constant 0 : index
    %c0_11 = arith.constant 0 : index
    %10 = vector.load %arg7[%c0_10, %c0_11] : memref<1x128xf32, #tpu.memory_space<vmem>>, vector<1x128xf32>
    %11 = vector.broadcast %10 : vector<1x128xf32> to vector<8x128xf32>
    %12 = arith.mulf %3, %11 : vector<8x128xf32>
    %c0_12 = arith.constant 0 : index
    %c0_13 = arith.constant 0 : index
    %13 = vector.load %arg5[%c0_12, %c0_13] : memref<128x128xf32, #tpu.memory_space<vmem>>, vector<128x128xf32>
    %cst_14 = arith.constant dense<0.000000e+00> : vector<8x128xf32>
    %14 = tpu.matmul %12, %13, %cst_14 {dimension_numbers = #tpu.dot_dimension_numbers<[1], [0], [0], [1], [0, 0, 1, 1], [], []>} : vector<8x128xf32>, vector<128x128xf32>, vector<8x128xf32> -> vector<8x128xf32>
    %15 = arith.addf %9, %14 : vector<8x128xf32>
    %c0_15 = arith.constant 0 : index
    %c0_16 = arith.constant 0 : index
    %16 = vector.load %arg9[%c0_15, %c0_16] : memref<8x128xf32, #tpu.memory_space<vmem>>, vector<8x128xf32>
    tpu.vector_store %arg9[%c0_15, %c0_16], %15 {strides = array<i32>} : memref<8x128xf32, #tpu.memory_space<vmem>>, vector<8x128xf32>,
    %c0_i32_17 = arith.constant 0 : i32
    %17 = arith.cmpi eq, %arg2, %c0_i32_17 : i32
    %18 = arith.extui %17 : i1 to i32
    %c0_i32_18 = arith.constant 0 : i32
    %19 = arith.cmpi ne, %18, %c0_i32_18 : i32
    scf.if %19 {
      %c0_19 = arith.constant 0 : index
      %c0_20 = arith.constant 0 : index
      %20 = vector.load %arg9[%c0_19, %c0_20] : memref<8x128xf32, #tpu.memory_space<vmem>>, vector<8x128xf32>
      %c0_21 = arith.constant 0 : index
      %c0_22 = arith.constant 0 : index
      %21 = vector.load %arg6[%c0_21, %c0_22] : memref<1x128xf32, #tpu.memory_space<vmem>>, vector<1x128xf32>
      %22 = vector.broadcast %21 : vector<1x128xf32> to vector<8x128xf32>
      %23 = arith.addf %20, %22 : vector<8x128xf32>
      %c0_23 = arith.constant 0 : index
      %c0_24 = arith.constant 0 : index
      %24 = vector.load %arg8[%c0_23, %c0_24] : memref<8x128xf32, #tpu.memory_space<vmem>>, vector<8x128xf32>
      tpu.vector_store %arg8[%c0_23, %c0_24], %23 {strides = array<i32>} : memref<8x128xf32, #tpu.memory_space<vmem>>, vector<8x128xf32>,
    } else {
    }
    return
  }
  func.func @transform_0(%arg0: i32, %arg1: i32, %arg2: i32) -> (i32, i32) {
    %c0_i32 = arith.constant 0 : i32
    return %arg0, %arg2 : i32, i32
  }
  func.func @transform_1(%arg0: i32, %arg1: i32, %arg2: i32) -> (i32, i32) {
    %c0_i32 = arith.constant 0 : i32
    return %arg2, %arg1 : i32, i32
  }
  func.func @transform_2(%arg0: i32, %arg1: i32, %arg2: i32) -> (i32, i32) {
    %c0_i32 = arith.constant 0 : i32
    return %arg2, %arg1 : i32, i32
  }
  func.func @transform_3(%arg0: i32, %arg1: i32, %arg2: i32) -> (i32, i32) {
    %c0_i32 = arith.constant 0 : i32
    %c0_i32_0 = arith.constant 0 : i32
    return %c0_i32, %arg1 : i32, i32
  }
  func.func @transform_4(%arg0: i32, %arg1: i32, %arg2: i32) -> (i32, i32) {
    %c0_i32 = arith.constant 0 : i32
    %c0_i32_0 = arith.constant 0 : i32
    return %c0_i32, %arg2 : i32, i32
  }
  func.func @transform_5(%arg0: i32, %arg1: i32, %arg2: i32) -> (i32, i32) {
    %c0_i32 = arith.constant 0 : i32
    return %arg0, %arg1 : i32, i32
  }
}

</mosaic_0001>

<llo_original>
// kernel: tpu_custom_call.1
$region0: #{tpu_custom_call.1}
  #allocation0 [shape = 'u32[]', space=smem, size = 0x4, offset = 0x4, fixed_abs, tag = 'smem constant byte address 0x4 - core index']
  #allocation1 [shape = 'u32[144,128]{1,0:T(1,128)}', space=vmem, size = 0x12000, scoped, tag = 'internal scratch']
  #allocation2 [shape = 'f32[8,128]{1,0:T(8,128)}', space=vmem, size = 0x1000, scoped, tag = 'scratch operand']
  %s0 = inlined_call_operand.hbm [shape: f32[8,128], index: 0, kind: input, shape index: {}]
  %s1 = inlined_call_operand.hbm [shape: f32[128,128], index: 1, kind: input, shape index: {}]
  %s2 = inlined_call_operand.hbm [shape: f32[128,128], index: 2, kind: input, shape index: {}]
  %s3 = inlined_call_operand.vmem [shape: f32[1,128], index: 3, kind: input, shape index: {}]
  %s4 = inlined_call_operand.vmem [shape: f32[1,128], index: 4, kind: input, shape index: {}]
  %s5 = inlined_call_operand.hbm [shape: f32[8,128], index: 5, kind: output, shape index: {}]
  %s6 = sld [smem:[#allocation0]]
  $region50: #{tpu_custom_call.1} parent=0
    _
  %s8 = ssub.s32 1, %s6
  %s9 = scalar_select 0, %s8, %s6
  $region1: #{tpu_custom_call.1} parent=0
    #allocation3 [shape = 'u8[4096]{0}', space=vmem, size = 0x1000, scoped, tag = 'input window, operand 0, single buffered']
    #allocation4 [shape = 's32[1]{0}', space=sflag, size = 0x4, scoped, tag = 'scoped memory for tpu_custom_call.1']
    #allocation5 [shape = 's32[1]{0}', space=sflag, size = 0x4, scoped, tag = 'scoped memory for tpu_custom_call.1']
    #allocation6 [shape = 'u8[65536]{0}', space=vmem, size = 0x10000, scoped, tag = 'input window, operand 1, single buffered']
    #allocation7 [shape = 's32[1]{0}', space=sflag, size = 0x4, scoped, tag = 'scoped memory for tpu_custom_call.1']
    #allocation8 [shape = 'u8[65536]{0}', space=vmem, size = 0x10000, scoped, tag = 'input window, operand 2, single buffered']
    #allocation9 [shape = 'u8[4096]{0}', space=vmem, size = 0x1000, scoped, tag = 'output window, operand 0, single buffered']
    %10 = vsyncpa [#allocation4], 0
    %11 = vsyncpa [#allocation7], 0
    %12 = vsyncpa [#allocation5], 0
    // Predicated region
    $region2: #{tpu_custom_call.1} parent=1 // pred_check
      _
    $region3: #{tpu_custom_call.1} parent=1 // pred_check_branch
      %14 = sbr.rel (0) target = $region5
    $region4: #{tpu_custom_call.1} parent=1 // pred_region
      %s16 = ssub.s32 128, 128
      %17 = vsyncadd [#allocation4], %s16
      %s19 = sshll.u32 [#allocation3], 4
      %s20 = int_to_ptr.vmem [resolvable:$true] %s19
      %22 = dma.hbm_to_vmem [thread:$0]  %s0, 128, %s20, [#allocation4]
    $region5: #{tpu_custom_call.1} parent=1 // pred_fallthru
      _
    // Predicated region
    $region6: #{tpu_custom_call.1} parent=1 // pred_check
      _
    $region7: #{tpu_custom_call.1} parent=1 // pred_check_branch
      %24 = sbr.rel (0) target = $region9
    $region8: #{tpu_custom_call.1} parent=1 // pred_region
      %s26 = ssub.s32 2048, 2048
      %27 = vsyncadd [#allocation7], %s26
      %s28 = sshll.u32 [#allocation6], 4
      %s29 = int_to_ptr.vmem [resolvable:$true] %s28
      %34 = dma.hbm_to_vmem [thread:$0]  %s1, 2048, %s29, [#allocation7], 128, 128, 8
    $region9: #{tpu_custom_call.1} parent=1 // pred_fallthru
      _
    // Predicated region
    $region10: #{tpu_custom_call.1} parent=1 // pred_check
      _
    $region11: #{tpu_custom_call.1} parent=1 // pred_check_branch
      %36 = sbr.rel (0) target = $region13
    $region12: #{tpu_custom_call.1} parent=1 // pred_region
      %s38 = ssub.s32 2048, 2048
      %39 = vsyncadd [#allocation7], %s38
      %s40 = sshll.u32 [#allocation8], 4
      %s41 = int_to_ptr.vmem [resolvable:$true] %s40
      %46 = dma.hbm_to_vmem [thread:$0]  %s2, 2048, %s41, [#allocation7], 128, 128, 8
    $region13: #{tpu_custom_call.1} parent=1 // pred_fallthru
      _
    // Predicated region
    $region14: #{tpu_custom_call.1} parent=1 // pred_check
      _
    $region15: #{tpu_custom_call.1} parent=1 // pred_check_branch
      %48 = sbr.rel (0) target = $region17
    $region16: #{tpu_custom_call.1} parent=1 // pred_region
      _
    $region17: #{tpu_custom_call.1} parent=1 // pred_fallthru
      _
    // Predicated region
    $region18: #{tpu_custom_call.1} parent=1 // pred_check
      _
    $region19: #{tpu_custom_call.1} parent=1 // pred_check_branch
      %50 = sbr.rel (0) target = $region21
    $region20: #{tpu_custom_call.1} parent=1 // pred_region
      _
    $region21: #{tpu_custom_call.1} parent=1 // pred_fallthru
      _
    // Predicated region
    $region22: #{tpu_custom_call.1} parent=1 // pred_check
      _
    $region23: #{tpu_custom_call.1} parent=1 // pred_check_branch
      %52 = sbr.rel (0) target = $region25
    $region24: #{tpu_custom_call.1} parent=1 // pred_region
      %53 = dma.done [#allocation4], 128
    $region25: #{tpu_custom_call.1} parent=1 // pred_fallthru
      _
    // Predicated region
    $region26: #{tpu_custom_call.1} parent=1 // pred_check
      _
    $region27: #{tpu_custom_call.1} parent=1 // pred_check_branch
      %55 = sbr.rel (0) target = $region29
    $region28: #{tpu_custom_call.1} parent=1 // pred_region
      %56 = dma.done [#allocation7], 2048
    $region29: #{tpu_custom_call.1} parent=1 // pred_fallthru
      _
    // Predicated region
    $region30: #{tpu_custom_call.1} parent=1 // pred_check
      _
    $region31: #{tpu_custom_call.1} parent=1 // pred_check_branch
      %58 = sbr.rel (0) target = $region33
    $region32: #{tpu_custom_call.1} parent=1 // pred_region
      %59 = dma.done [#allocation7], 2048
    $region33: #{tpu_custom_call.1} parent=1 // pred_fallthru
      _
    %p60 = scmp.eq.s32.totalorder 0, 0
    // Predicated region
    $region34: #{tpu_custom_call.1} parent=1 // pred_check
      %p61 = pneg %p60
    $region35: #{tpu_custom_call.1} parent=1 // pred_check_branch
      %63 = sbr.rel (%p61) target = $region37
    $region36: #{tpu_custom_call.1} parent=1 // pred_region
      %64 = vst [vmem:[#allocation2] sm:$0xff] 0.0
    $region37: #{tpu_custom_call.1} parent=1 // pred_fallthru
      _
    %v65 = vld [vmem:[#allocation3] sm:$0xff]
    %v66 = vld [vmem:[#allocation2] sm:$0xff]
    %v67 = vld [vmem:[#allocation6] sm:$0xff]
    %v68 = vld [vmem:[#allocation6 + $0x8] sm:$0xff]
    %v69 = vld [vmem:[#allocation6 + $0x10] sm:$0xff]
    %v70 = vld [vmem:[#allocation6 + $0x18] sm:$0xff]
    %v71 = vld [vmem:[#allocation6 + $0x20] sm:$0xff]
    %v72 = vld [vmem:[#allocation6 + $0x28] sm:$0xff]
    %v73 = vld [vmem:[#allocation6 + $0x30] sm:$0xff]
    %v74 = vld [vmem:[#allocation6 + $0x38] sm:$0xff]
    %v75 = vld [vmem:[#allocation6 + $0x40] sm:$0xff]
    %v76 = vld [vmem:[#allocation6 + $0x48] sm:$0xff]
    %v77 = vld [vmem:[#allocation6 + $0x50] sm:$0xff]
    %v78 = vld [vmem:[#allocation6 + $0x58] sm:$0xff]
    %v79 = vld [vmem:[#allocation6 + $0x60] sm:$0xff]
    %v80 = vld [vmem:[#allocation6 + $0x68] sm:$0xff]
    %v81 = vld [vmem:[#allocation6 + $0x70] sm:$0xff]
    %v82 = vld [vmem:[#allocation6 + $0x78] sm:$0xff]
    %83 = vmatprep.subr.mxu0 0.0
    %84 = vmatpush1.msra.mxu0 %v67
    %85 = vmatprep.subr.mxu0 0.0
    %86 = vmatpush1.msra.mxu0 %v68
    %87 = vmatprep.subr.mxu0 0.0
    %88 = vmatpush1.msra.mxu0 %v69
    %89 = vmatprep.subr.mxu0 0.0
    %90 = vmatpush1.msra.mxu0 %v70
    %91 = vmatprep.subr.mxu0 0.0
    %92 = vmatpush1.msra.mxu0 %v71
    %93 = vmatprep.subr.mxu0 0.0
    %94 = vmatpush1.msra.mxu0 %v72
    %95 = vmatprep.subr.mxu0 0.0
    %96 = vmatpush1.msra.mxu0 %v73
    %97 = vmatprep.subr.mxu0 0.0
    %98 = vmatpush1.msra.mxu0 %v74
    %99 = vmatprep.subr.mxu0 0.0
    %100 = vmatpush1.msra.mxu0 %v75
    %101 = vmatprep.subr.mxu0 0.0
    %102 = vmatpush1.msra.mxu0 %v76
    %103 = vmatprep.subr.mxu0 0.0
    %104 = vmatpush1.msra.mxu0 %v77
    %105 = vmatprep.subr.mxu0 0.0
    %106 = vmatpush1.msra.mxu0 %v78
    %107 = vmatprep.subr.mxu0 0.0
    %108 = vmatpush1.msra.mxu0 %v79
    %109 = vmatprep.subr.mxu0 0.0
    %110 = vmatpush1.msra.mxu0 %v80
    %111 = vmatprep.subr.mxu0 0.0
    %112 = vmatpush1.msra.mxu0 %v81
    %113 = vmatprep.subr.mxu0 0.0
    %114 = vmatpush1.msra.mxu0 %v82
    %115 = vmatprep.subr.mxu0 0.0
    %116 = vmatpush1.msra.mxu0 0.0
    %117 = vmatprep.subr.mxu0 0.0
    %118 = vmatpush1.msra.mxu0 0.0
    %119 = vmatprep.subr.mxu0 0.0
    %120 = vmatpush1.msra.mxu0 0.0
    %121 = vmatprep.subr.mxu0 0.0
    %122 = vmatpush1.msra.mxu0 0.0
    %123 = vmatprep.subr.mxu0 0.0
    %124 = vmatpush1.msra.mxu0 0.0
    %125 = vmatprep.subr.mxu0 0.0
    %126 = vmatpush1.msra.mxu0 0.0
    %127 = vmatprep.subr.mxu0 0.0
    %128 = vmatpush1.msra.mxu0 0.0
    %129 = vmatprep.subr.mxu0 0.0
    %130 = vmatpush1.msra.mxu0 0.0
    %131 = vmatprep.subr.mxu0 0.0
    %132 = vmatpush1.msra.mxu0 0.0
    %133 = vmatprep.subr.mxu0 0.0
    %134 = vmatpush1.msra.mxu0 0.0
    %135 = vmatprep.subr.mxu0 0.0
    %136 = vmatpush1.msra.mxu0 0.0
    %137 = vmatprep.subr.mxu0 0.0
    %138 = vmatpush1.msra.mxu0 0.0
    %139 = vmatprep.subr.mxu0 0.0
    %140 = vmatpush1.msra.mxu0 0.0
    %141 = vmatprep.subr.mxu0 0.0
    %142 = vmatpush1.msra.mxu0 0.0
    %143 = vmatprep.subr.mxu0 0.0
    %144 = vmatpush1.msra.mxu0 0.0
    %145 = vmatprep.subr.mxu0 0.0
    %146 = vmatpush1.msra.mxu0 0.0
    %147 = vmatprep.mubr.f32.mxu0 0.0
    %148 = vmatmul.mubr.f32.gmra.mrb[0].mxu0 %v65
    %v149 = vpop.f32.mrb[0].mxu0
    %v150 = vadd.f32 0.0, %v149
    %v151 = vpop.f32.mrb[0].mxu0
    %152 = vdwg.mxu0
    %v153 = vadd.f32 %v66, %v150
    %154 = vst [vmem:[#allocation2] sm:$0xff] %v153
    %v155 = vld [vmem:[#allocation2] sm:$0xff]
    %v156 = vld [vmem:[%s4] sm:$0x1]
    %v158 = vlaneseq
    %v159 = vshrl.u32 %v158, 7
    %v160 = vsub.s32 0, %v159
    %v161 = vrot.slane %v156, %v160
    %v163 = vmul.f32 %v65, %v161
    %v164 = vld [vmem:[#allocation8] sm:$0xff]
    %v165 = vld [vmem:[#allocation8 + $0x8] sm:$0xff]
    %v166 = vld [vmem:[#allocation8 + $0x10] sm:$0xff]
    %v167 = vld [vmem:[#allocation8 + $0x18] sm:$0xff]
    %v168 = vld [vmem:[#allocation8 + $0x20] sm:$0xff]
    %v169 = vld [vmem:[#allocation8 + $0x28] sm:$0xff]
    %v170 = vld [vmem:[#allocation8 + $0x30] sm:$0xff]
    %v171 = vld [vmem:[#allocation8 + $0x38] sm:$0xff]
    %v172 = vld [vmem:[#allocation8 + $0x40] sm:$0xff]
    %v173 = vld [vmem:[#allocation8 + $0x48] sm:$0xff]
    %v174 = vld [vmem:[#allocation8 + $0x50] sm:$0xff]
    %v175 = vld [vmem:[#allocation8 + $0x58] sm:$0xff]
    %v176 = vld [vmem:[#allocation8 + $0x60] sm:$0xff]
    %v177 = vld [vmem:[#allocation8 + $0x68] sm:$0xff]
    %v178 = vld [vmem:[#allocation8 + $0x70] sm:$0xff]
    %v179 = vld [vmem:[#allocation8 + $0x78] sm:$0xff]
    %180 = vmatprep.subr.mxu0 0.0
    %181 = vmatpush1.msra.mxu0 %v164
    %182 = vmatprep.subr.mxu0 0.0
    %183 = vmatpush1.msra.mxu0 %v165
    %184 = vmatprep.subr.mxu0 0.0
    %185 = vmatpush1.msra.mxu0 %v166
    %186 = vmatprep.subr.mxu0 0.0
    %187 = vmatpush1.msra.mxu0 %v167
    %188 = vmatprep.subr.mxu0 0.0
    %189 = vmatpush1.msra.mxu0 %v168
    %190 = vmatprep.subr.mxu0 0.0
    %191 = vmatpush1.msra.mxu0 %v169
    %192 = vmatprep.subr.mxu0 0.0
    %193 = vmatpush1.msra.mxu0 %v170
    %194 = vmatprep.subr.mxu0 0.0
    %195 = vmatpush1.msra.mxu0 %v171
    %196 = vmatprep.subr.mxu0 0.0
    %197 = vmatpush1.msra.mxu0 %v172
    %198 = vmatprep.subr.mxu0 0.0
    %199 = vmatpush1.msra.mxu0 %v173
    %200 = vmatprep.subr.mxu0 0.0
    %201 = vmatpush1.msra.mxu0 %v174
    %202 = vmatprep.subr.mxu0 0.0
    %203 = vmatpush1.msra.mxu0 %v175
    %204 = vmatprep.subr.mxu0 0.0
    %205 = vmatpush1.msra.mxu0 %v176
    %206 = vmatprep.subr.mxu0 0.0
    %207 = vmatpush1.msra.mxu0 %v177
    %208 = vmatprep.subr.mxu0 0.0
    %209 = vmatpush1.msra.mxu0 %v178
    %210 = vmatprep.subr.mxu0 0.0
    %211 = vmatpush1.msra.mxu0 %v179
    %212 = vmatprep.subr.mxu0 0.0
    %213 = vmatpush1.msra.mxu0 0.0
    %214 = vmatprep.subr.mxu0 0.0
    %215 = vmatpush1.msra.mxu0 0.0
    %216 = vmatprep.subr.mxu0 0.0
    %217 = vmatpush1.msra.mxu0 0.0
    %218 = vmatprep.subr.mxu0 0.0
    %219 = vmatpush1.msra.mxu0 0.0
    %220 = vmatprep.subr.mxu0 0.0
    %221 = vmatpush1.msra.mxu0 0.0
    %222 = vmatprep.subr.mxu0 0.0
    %223 = vmatpush1.msra.mxu0 0.0
    %224 = vmatprep.subr.mxu0 0.0
    %225 = vmatpush1.msra.mxu0 0.0
    %226 = vmatprep.subr.mxu0 0.0
    %227 = vmatpush1.msra.mxu0 0.0
    %228 = vmatprep.subr.mxu0 0.0
    %229 = vmatpush1.msra.mxu0 0.0
    %230 = vmatprep.subr.mxu0 0.0
    %231 = vmatpush1.msra.mxu0 0.0
    %232 = vmatprep.subr.mxu0 0.0
    %233 = vmatpush1.msra.mxu0 0.0
    %234 = vmatprep.subr.mxu0 0.0
    %235 = vmatpush1.msra.mxu0 0.0
    %236 = vmatprep.subr.mxu0 0.0
    %237 = vmatpush1.msra.mxu0 0.0
    %238 = vmatprep.subr.mxu0 0.0
    %239 = vmatpush1.msra.mxu0 0.0
    %240 = vmatprep.subr.mxu0 0.0
    %241 = vmatpush1.msra.mxu0 0.0
    %242 = vmatprep.subr.mxu0 0.0
    %243 = vmatpush1.msra.mxu0 0.0
    %244 = vmatprep.mubr.f32.mxu0 0.0
    %245 = vmatmul.mubr.f32.gmra.mrb[0].mxu0 %v163
    %v246 = vpop.f32.mrb[0].mxu0
    %v247 = vadd.f32 0.0, %v246
    %v248 = vpop.f32.mrb[0].mxu0
    %249 = vdwg.mxu0
    %v250 = vadd.f32 %v155, %v247
    %251 = vst [vmem:[#allocation2] sm:$0xff] %v250
    // Predicated region
    $region38: #{tpu_custom_call.1} parent=1 // pred_check
      %p252 = pneg %p60
    $region39: #{tpu_custom_call.1} parent=1 // pred_check_branch
      %254 = sbr.rel (%p252) target = $region41
    $region40: #{tpu_custom_call.1} parent=1 // pred_region
      %v255 = vld [vmem:[#allocation2] sm:$0xff]
      %v256 = vld [vmem:[%s3] sm:$0x1]
      %v258 = vlaneseq
      %v259 = vshrl.u32 %v258, 7
      %v260 = vsub.s32 0, %v259
      %v261 = vrot.slane %v256, %v260
      %v263 = vadd.f32 %v255, %v261
      %264 = vst [vmem:[#allocation9] sm:$0xff] %v263
    $region41: #{tpu_custom_call.1} parent=1 // pred_fallthru
      _
    // Predicated region
    $region42: #{tpu_custom_call.1} parent=1 // pred_check
      _
    $region43: #{tpu_custom_call.1} parent=1 // pred_check_branch
      %266 = sbr.rel (0) target = $region45
    $region44: #{tpu_custom_call.1} parent=1 // pred_region
      %s268 = ssub.s32 128, 128
      %269 = vsyncadd [#allocation5], %s268
      %s271 = sshll.u32 [#allocation9], 4
      %s272 = int_to_ptr.vmem [resolvable:$true] %s271
      %274 = dma.vmem_to_hbm [thread:$0]  %s272, 128, %s5, [#allocation5]
    $region45: #{tpu_custom_call.1} parent=1 // pred_fallthru
      _
    // Predicated region
    $region46: #{tpu_custom_call.1} parent=1 // pred_check
      _
    $region47: #{tpu_custom_call.1} parent=1 // pred_check_branch
      %276 = sbr.rel (0) target = $region49
    $region48: #{tpu_custom_call.1} parent=1 // pred_region
      %277 = dma.done [#allocation5], 128
    $region49: #{tpu_custom_call.1} parent=1 // pred_fallthru
      _
    %278 = vsyncpa [#allocation4], 1
    %279 = vsyncpa [#allocation7], 1
    %280 = vsyncpa [#allocation5], 1

</llo_original>
